<compile_context>
chip_gen: v7x
topology: tpu7x:2x2x1
jax: 0.10.0
libtpu: 0.0.40
codegen_flags: <defaults>
</compile_context>

<pallas_src>
import functools

import jax
import jax.numpy as jnp
from jax.experimental import pallas as pl
from jax.experimental.pallas import tpu as pltpu


def _round_up(n, m):
    return ((n + m - 1) // m) * m


# ----------------------------------------------------------------------------
# Kernel body: one (TM, D_pad) batch tile through the whole residual block.
# Shared by the single-block and ensemble paths (the ensemble E dim is a
# squeezed leading block dim, so refs look identical).
# ----------------------------------------------------------------------------
def _residual_block_kernel(x_ref, w1_ref, b1_ref, w2_ref, b2_ref, o_ref):
    x = x_ref[...]                                           # (TM, D_pad) f32

    # Dropout == identity in eval mode.
    # Linear1 (+ folded BN1) -> ReLU
    h = jnp.dot(x.astype(w1_ref.dtype), w1_ref[...],
                preferred_element_type=jnp.float32)
    h = jnp.maximum(h + b1_ref[...], 0.0)

    # Linear2 (+ folded BN2)
    y = jnp.dot(h.astype(w2_ref.dtype), w2_ref[...],
                preferred_element_type=jnp.float32)
    y = y + b2_ref[...]

    # Residual add + ReLU (f32 epilogue)
    o_ref[...] = jnp.maximum(x + y, 0.0).astype(o_ref.dtype)


# ----------------------------------------------------------------------------
# Hardware / feature queries (cached, evaluated lazily on first forward call).
# ----------------------------------------------------------------------------
@functools.cache
def _vmem_capacity_bytes():
    try:
        return int(pltpu.get_tpu_info().vmem_capacity_bytes)
    except Exception:
        return 64 * 1024 * 1024          # v7x per-TC VMEM; safe lower bound


@functools.cache
def _single_buffer_mode():
    """Return pl.Buffered(1) if single-buffered constant-index inputs are
    supported by this jax/Mosaic build, else None (default double-buffer)."""
    try:
        def k(x_ref, o_ref):
            o_ref[...] = x_ref[...] + 1.0

        out = pl.pallas_call(
            k,
            out_shape=jax.ShapeDtypeStruct((16, 128), jnp.float32),
            grid=(2,),
            in_specs=[pl.BlockSpec((8, 128), lambda i: (0, 0),
                                   pipeline_mode=pl.Buffered(1))],
            out_specs=pl.BlockSpec((8, 128), lambda i: (i, 0)),
        )(jnp.zeros((8, 128), jnp.float32))
        jax.block_until_ready(out)
        return pl.Buffered(1)
    except Exception:
        return None


def _vmem_limit(vmem_use_bytes):
    cap = _vmem_capacity_bytes()
    return int(min(cap - 4 * 1024 * 1024,
                   max(32 * 1024 * 1024, vmem_use_bytes + 4 * 1024 * 1024)))


def _choose_tile(B, D_pad, weight_bytes, *, block_rows=512):
    """Pick (tm, n_steps, B_pad): fit VMEM, keep >=2 grid steps when the batch
    allows it (v7x 2-TC sharding), and minimize batch padding (<= 7 rows)."""
    B8 = _round_up(max(B, 8), 8)

    budget = _vmem_capacity_bytes() - 8 * 1024 * 1024        # compiler headroom
    tile_budget = max(budget - weight_bytes, 2 * 2 * 8 * D_pad * 4)
    tm_vmem = max(8, int(tile_budget // (2 * 2 * D_pad * 4)) // 8 * 8)

    tm = min(block_rows, tm_vmem)
    if B8 >= 16:                         # expose >=2 steps for v7x megacore
        tm = min(tm, _round_up(pl.cdiv(B8, 2), 8))
    tm = max(8, min(tm, B8))

    n_steps = pl.cdiv(B8, tm)
    tm = _round_up(pl.cdiv(B8, n_steps), 8)         # minimize padded rows
    return tm, n_steps, n_steps * tm


# ----------------------------------------------------------------------------
# One-time parameter prep (hoisted out of the forward call): fold BN + bias,
# then zero-pad to lane-dense (D_pad, D_pad) / (1, D_pad).  Padded weight
# rows/cols + zero bias keep padded lanes exactly 0 through ReLU and the
# residual add.
# ----------------------------------------------------------------------------
def fold_linear_bn(w, b, gamma, beta, mean, var, *, eps=1e-5,
                   weight_dtype=jnp.bfloat16):
    """w: (out, in) PyTorch layout; returns W' (in, out) and b' (1, out) s.t.
    x @ W' + b' == BN_eval(x @ w.T + b)."""
    scale = gamma / jnp.sqrt(var + eps)
    shift = beta - mean * scale
    w_folded = (w.T * scale[None, :]).astype(weight_dtype)
    b_folded = (b * scale + shift).reshape(1, -1).astype(jnp.float32)
    return w_folded, b_folded


def prepare_params(raw, *, eps=1e-5, weight_dtype=jnp.bfloat16):
    (w1, b1, g1, be1, m1, v1, w2, b2, g2, be2, m2, v2) = raw
    w1f, b1f = fold_linear_bn(w1, b1, g1, be1, m1, v1, eps=eps,
                              weight_dtype=weight_dtype)
    w2f, b2f = fold_linear_bn(w2, b2, g2, be2, m2, v2, eps=eps,
                              weight_dtype=weight_dtype)
    D = w1f.shape[0]
    D_pad = _round_up(D, 128)

    def pad_w(w):
        return jnp.zeros((D_pad, D_pad), w.dtype).at[:D, :D].set(w)

    def pad_b(b):
        return jnp.zeros((1, D_pad), jnp.float32).at[:, :D].set(b)

    return dict(w1=pad_w(w1f), b1=pad_b(b1f), w2=pad_w(w2f), b2=pad_b(b2f),
                dim=D, dim_pad=D_pad)


def prepare_params_ensemble(raw_list, *, eps=1e-5, weight_dtype=jnp.bfloat16):
    """Stack E members' prepared params: (E, D_pad, D_pad) / (E, 1, D_pad)."""
    ps = [prepare_params(r, eps=eps, weight_dtype=weight_dtype)
          for r in raw_list]
    return dict(
        w1=jnp.stack([p["w1"] for p in ps]),
        b1=jnp.stack([p["b1"] for p in ps]),
        w2=jnp.stack([p["w2"] for p in ps]),
        b2=jnp.stack([p["b2"] for p in ps]),
        dim=ps[0]["dim"], dim_pad=ps[0]["dim_pad"])


# ----------------------------------------------------------------------------
# Forward wrappers.
# ----------------------------------------------------------------------------
def residual_block(x, params, *, block_rows=512):
    """Eval-mode forward of one ResidualBlock.  x: (B, dim) -> (B, dim)."""
    B, D = x.shape
    assert D == params["dim"]
    D_pad = params["dim_pad"]
    w1, b1, w2, b2 = params["w1"], params["b1"], params["w2"], params["b2"]
    w_itemsize = jnp.dtype(w1.dtype).itemsize

    mode = _single_buffer_mode()                 # pl.Buffered(1) or None
    n_wbuf = 1 if mode is not None else 2
    weight_bytes = n_wbuf * 2 * (D_pad * D_pad * w_itemsize + D_pad * 4)
    tm, n_steps, B_pad = _choose_tile(B, D_pad, weight_bytes,
                                      block_rows=block_rows)

    # Fast path: aligned input goes straight to the kernel (no pad copy).
    if (B_pad, D_pad) == (B, D):
        xp = x.astype(jnp.float32)
    else:
        xp = jnp.zeros((B_pad, D_pad), jnp.float32).at[:B, :D].set(
            x.astype(jnp.float32))

    def call(weight_mode):
        if weight_mode is None:
            def w_spec():
                return pl.BlockSpec((D_pad, D_pad), lambda i: (0, 0))

            def b_spec():
                return pl.BlockSpec((1, D_pad), lambda i: (0, 0))
            wbuf = 2
        else:
            def w_spec():
                return pl.BlockSpec((D_pad, D_pad), lambda i: (0, 0),
                                    pipeline_mode=weight_mode)

            def b_spec():
                return pl.BlockSpec((1, D_pad), lambda i: (0, 0),
                                    pipeline_mode=weight_mode)
            wbuf = 1

        vmem_use = (wbuf * 2 * (D_pad * D_pad * w_itemsize + D_pad * 4)
                    + 2 * 2 * tm * D_pad * 4)            # x + out, 2-buffered
        return pl.pallas_call(
            _residual_block_kernel,
            out_shape=jax.ShapeDtypeStruct((B_pad, D_pad), jnp.float32),
            grid_spec=pltpu.PrefetchScalarGridSpec(
                num_scalar_prefetch=0,
                grid=(n_steps,),
                in_specs=[
                    pl.BlockSpec((tm, D_pad), lambda i: (i, 0)),   # x tile
                    w_spec(), b_spec(), w_spec(), b_spec(),        # resident
                ],
                out_specs=pl.BlockSpec((tm, D_pad), lambda i: (i, 0)),
            ),
            compiler_params=pltpu.CompilerParams(
                dimension_semantics=("parallel",),     # batch shards on v7x
                vmem_limit_bytes=_vmem_limit(vmem_use),
            ),
        )(xp, w1, b1, w2, b2)

    out = None
    if mode is not None:
        try:
            out = call(mode)
        except Exception:
            out = None
    if out is None:
        out = call(None)

    if (B_pad, D_pad) == (B, D):
        return out
    return out[:B, :D]


def residual_block_ensemble(x, params, *, block_rows=512):
    """Eval-mode forward of E independent ResidualBlocks fused in one
    pallas_call.  x: (E, B, dim); params from prepare_params_ensemble."""
    E, B, D = x.shape
    assert D == params["dim"]
    D_pad = params["dim_pad"]
    w1, b1, w2, b2 = params["w1"], params["b1"], params["w2"], params["b2"]
    w_itemsize = jnp.dtype(w1.dtype).itemsize

    # Weights change along the ensemble grid axis -> keep default double
    # buffering so member e+1's weights prefetch behind member e's compute.
    weight_bytes = 2 * 2 * (D_pad * D_pad * w_itemsize + D_pad * 4)
    tm, n_steps, B_pad = _choose_tile(B, D_pad, weight_bytes,
                                      block_rows=block_rows)

    if (B_pad, D_pad) == (B, D):
        xp = x.astype(jnp.float32)
    else:
        xp = jnp.zeros((E, B_pad, D_pad), jnp.float32).at[:, :B, :D].set(
            x.astype(jnp.float32))

    vmem_use = weight_bytes + 2 * 2 * tm * D_pad * 4

    out = pl.pallas_call(
        _residual_block_kernel,
        out_shape=jax.ShapeDtypeStruct((E, B_pad, D_pad), jnp.float32),
        grid_spec=pltpu.PrefetchScalarGridSpec(
            num_scalar_prefetch=0,
            grid=(E, n_steps),
            in_specs=[
                pl.BlockSpec((None, tm, D_pad), lambda e, i: (e, i, 0)),
                pl.BlockSpec((None, D_pad, D_pad), lambda e, i: (e, 0, 0)),
                pl.BlockSpec((None, 1, D_pad), lambda e, i: (e, 0, 0)),
                pl.BlockSpec((None, D_pad, D_pad), lambda e, i: (e, 0, 0)),
                pl.BlockSpec((None, 1, D_pad), lambda e, i: (e, 0, 0)),
            ],
            out_specs=pl.BlockSpec((None, tm, D_pad), lambda e, i: (e, i, 0)),
        ),
        compiler_params=pltpu.CompilerParams(
            dimension_semantics=("parallel", "parallel"),
            vmem_limit_bytes=_vmem_limit(vmem_use),
        ),
    )(xp, w1, b1, w2, b2)

    if (B_pad, D_pad) == (B, D):
        return out
    return out[:, :B, :D]


# ----------------------------------------------------------------------------
# Synthetic PyTorch-layout parameters + pure-JAX reference (eval mode).
# ----------------------------------------------------------------------------
def init_raw_params(key, dim):
    ks = jax.random.split(key, 12)

    def linear(kw, kb):
        w = jax.random.normal(kw, (dim, dim), jnp.float32) * 0.05   # (out, in)
        b = jax.random.normal(kb, (dim,), jnp.float32) * 0.05
        return w, b

    def bn(kg, kb, km, kv):
        gamma = 1.0 + 0.1 * jax.random.normal(kg, (dim,), jnp.float32)
        beta = 0.1 * jax.random.normal(kb, (dim,), jnp.float32)
        mean = 0.1 * jax.random.normal(km, (dim,), jnp.float32)
        var = jnp.abs(1.0 + 0.1 * jax.random.normal(kv, (dim,), jnp.float32))
        return gamma, beta, mean, var

    w1, b1 = linear(ks[0], ks[1])
    g1, be1, m1, v1 = bn(ks[2], ks[3], ks[4], ks[5])
    w2, b2 = linear(ks[6], ks[7])
    g2, be2, m2, v2 = bn(ks[8], ks[9], ks[10], ks[11])
    return (w1, b1, g1, be1, m1, v1, w2, b2, g2, be2, m2, v2)


def reference(x, raw, eps=1e-5):
    (w1, b1, g1, be1, m1, v1, w2, b2, g2, be2, m2, v2) = raw
    h = x @ w1.T + b1
    h = (h - m1) / jnp.sqrt(v1 + eps) * g1 + be1
    h = jnp.maximum(h, 0.0)
    y = h @ w2.T + b2
    y = (y - m2) / jnp.sqrt(v2 + eps) * g2 + be2
    return jnp.maximum(x + y, 0.0)


if __name__ == "__main__":
    B, DIM, E = 8, 32, 4     # ResidualBlock(dim=32, dropout_rate=0.1)

    key = jax.random.PRNGKey(0)
    kx, kp, ke, kxe = jax.random.split(key, 4)
    x = jax.random.normal(kx, (B, DIM), jnp.float32)
    raw = init_raw_params(kp, DIM)
    ref = reference(x, raw)

    # f32 folded weights: tight tolerance.
    params_f32 = prepare_params(raw, weight_dtype=jnp.float32)
    out = jax.block_until_ready(residual_block(x, params_f32))
    assert out.shape == (B, DIM)
    assert jnp.allclose(out, ref, atol=1e-4, rtol=1e-4), "f32 mismatch vs reference"

    # bf16 folded weights (default: halves weight DMA bytes on all gens).
    params_bf16 = prepare_params(raw)
    out_bf16 = jax.block_until_ready(residual_block(x, params_bf16))
    assert jnp.allclose(out_bf16, ref, atol=5e-2, rtol=5e-2), "bf16 mismatch vs reference"

    # Ensemble-fused path: E members' blocks in one pallas_call.
    raws = [init_raw_params(k, DIM) for k in jax.random.split(ke, E)]
    xe = jax.random.normal(kxe, (E, B, DIM), jnp.float32)
    ref_e = jnp.stack([reference(xe[i], raws[i]) for i in range(E)])
    params_e = prepare_params_ensemble(raws)
    out_e = jax.block_until_ready(residual_block_ensemble(xe, params_e))
    assert out_e.shape == (E, B, DIM)
    assert jnp.allclose(out_e, ref_e, atol=5e-2, rtol=5e-2), "ensemble mismatch vs reference"

    print("KERNEL_OK")
</pallas_src>

<mosaic_0001>
module attributes {stable_mosaic.version = 11 : i64} {
  func.func @k(%arg0: i32, %arg1: memref<8x128xf32, #tpu.memory_space<vmem>>, %arg2: memref<8x128xf32, #tpu.memory_space<vmem>>) attributes {dimension_semantics = [#tpu.dimension_semantics<arbitrary>], iteration_bounds = array<i64: 2>, scalar_prefetch = 0 : i64, scratch_operands = 0 : i64, tpu.core_type = #tpu.core_type<tc>, window_params = [{pipeline_mode = #tpu.pipeline_mode<synchronous>, transform_indices = @transform_0, window_bounds = array<i64: 8, 128>}, {transform_indices = @transform_1, window_bounds = array<i64: 8, 128>}]} {
    %c0 = arith.constant 0 : index
    %c0_0 = arith.constant 0 : index
    %0 = vector.load %arg1[%c0, %c0_0] : memref<8x128xf32, #tpu.memory_space<vmem>>, vector<8x128xf32>
    %cst = arith.constant 1.000000e+00 : f32
    %1 = vector.broadcast %cst : f32 to vector<8x128xf32>
    %2 = arith.addf %0, %1 : vector<8x128xf32>
    %c0_1 = arith.constant 0 : index
    %c0_2 = arith.constant 0 : index
    %3 = vector.load %arg2[%c0_1, %c0_2] : memref<8x128xf32, #tpu.memory_space<vmem>>, vector<8x128xf32>
    tpu.vector_store %arg2[%c0_1, %c0_2], %2 {strides = array<i32>} : memref<8x128xf32, #tpu.memory_space<vmem>>, vector<8x128xf32>,
    return
  }
  func.func @transform_0(%arg0: i32) -> (i32, i32) {
    %c0_i32 = arith.constant 0 : i32
    %c0_i32_0 = arith.constant 0 : i32
    %c0_i32_1 = arith.constant 0 : i32
    return %c0_i32, %c0_i32_0 : i32, i32
  }
  func.func @transform_1(%arg0: i32) -> (i32, i32) {
    %c0_i32 = arith.constant 0 : i32
    %c0_i32_0 = arith.constant 0 : i32
    return %arg0, %c0_i32 : i32, i32
  }
}

module attributes {stable_mosaic.version = 11 : i64} {
  func.func @_residual_block_kernel(%arg0: i32, %arg1: memref<8x128xf32, #tpu.memory_space<vmem>>, %arg2: memref<128x128xf32, #tpu.memory_space<vmem>>, %arg3: memref<1x128xf32, #tpu.memory_space<vmem>>, %arg4: memref<128x128xf32, #tpu.memory_space<vmem>>, %arg5: memref<1x128xf32, #tpu.memory_space<vmem>>, %arg6: memref<8x128xf32, #tpu.memory_space<vmem>>) attributes {dimension_semantics = [#tpu.dimension_semantics<parallel>], iteration_bounds = array<i64: 1>, scalar_prefetch = 0 : i64, scratch_operands = 0 : i64, tpu.core_type = #tpu.core_type<tc>, window_params = [{transform_indices = @transform_0, window_bounds = array<i64: 8, 128>}, {pipeline_mode = #tpu.pipeline_mode<synchronous>, transform_indices = @transform_1, window_bounds = array<i64: 128, 128>}, {pipeline_mode = #tpu.pipeline_mode<synchronous>, transform_indices = @transform_2, window_bounds = array<i64: 1, 128>}, {pipeline_mode = #tpu.pipeline_mode<synchronous>, transform_indices = @transform_3, window_bounds = array<i64: 128, 128>}, {pipeline_mode = #tpu.pipeline_mode<synchronous>, transform_indices = @transform_4, window_bounds = array<i64: 1, 128>}, {transform_indices = @transform_5, window_bounds = array<i64: 8, 128>}]} {
    %c0 = arith.constant 0 : index
    %c0_0 = arith.constant 0 : index
    %0 = vector.load %arg1[%c0, %c0_0] : memref<8x128xf32, #tpu.memory_space<vmem>>, vector<8x128xf32>
    %c0_1 = arith.constant 0 : index
    %c0_2 = arith.constant 0 : index
    %1 = vector.load %arg2[%c0_1, %c0_2] : memref<128x128xf32, #tpu.memory_space<vmem>>, vector<128x128xf32>
    %cst = arith.constant dense<0.000000e+00> : vector<8x128xf32>
    %2 = tpu.matmul %0, %1, %cst {dimension_numbers = #tpu.dot_dimension_numbers<[1], [0], [0], [1], [0, 0, 1, 1], [], []>} : vector<8x128xf32>, vector<128x128xf32>, vector<8x128xf32> -> vector<8x128xf32>
    %c0_3 = arith.constant 0 : index
    %c0_4 = arith.constant 0 : index
    %3 = vector.load %arg3[%c0_3, %c0_4] : memref<1x128xf32, #tpu.memory_space<vmem>>, vector<1x128xf32>
    %4 = vector.broadcast %3 : vector<1x128xf32> to vector<8x128xf32>
    %5 = arith.addf %2, %4 : vector<8x128xf32>
    %cst_5 = arith.constant 0.000000e+00 : f32
    %6 = vector.broadcast %cst_5 : f32 to vector<8x128xf32>
    %7 = arith.maximumf %5, %6 : vector<8x128xf32>
    %c0_6 = arith.constant 0 : index
    %c0_7 = arith.constant 0 : index
    %8 = vector.load %arg4[%c0_6, %c0_7] : memref<128x128xf32, #tpu.memory_space<vmem>>, vector<128x128xf32>
    %cst_8 = arith.constant dense<0.000000e+00> : vector<8x128xf32>
    %9 = tpu.matmul %7, %8, %cst_8 {dimension_numbers = #tpu.dot_dimension_numbers<[1], [0], [0], [1], [0, 0, 1, 1], [], []>} : vector<8x128xf32>, vector<128x128xf32>, vector<8x128xf32> -> vector<8x128xf32>
    %c0_9 = arith.constant 0 : index
    %c0_10 = arith.constant 0 : index
    %10 = vector.load %arg5[%c0_9, %c0_10] : memref<1x128xf32, #tpu.memory_space<vmem>>, vector<1x128xf32>
    %11 = vector.broadcast %10 : vector<1x128xf32> to vector<8x128xf32>
    %12 = arith.addf %9, %11 : vector<8x128xf32>
    %13 = arith.addf %0, %12 : vector<8x128xf32>
    %cst_11 = arith.constant 0.000000e+00 : f32
    %14 = vector.broadcast %cst_11 : f32 to vector<8x128xf32>
    %15 = arith.maximumf %13, %14 : vector<8x128xf32>
    %c0_12 = arith.constant 0 : index
    %c0_13 = arith.constant 0 : index
    %16 = vector.load %arg6[%c0_12, %c0_13] : memref<8x128xf32, #tpu.memory_space<vmem>>, vector<8x128xf32>
    tpu.vector_store %arg6[%c0_12, %c0_13], %15 {strides = array<i32>} : memref<8x128xf32, #tpu.memory_space<vmem>>, vector<8x128xf32>,
    return
  }
  func.func @transform_0(%arg0: i32) -> (i32, i32) {
    %c0_i32 = arith.constant 0 : i32
    %c0_i32_0 = arith.constant 0 : i32
    return %arg0, %c0_i32 : i32, i32
  }
  func.func @transform_1(%arg0: i32) -> (i32, i32) {
    %c0_i32 = arith.constant 0 : i32
    %c0_i32_0 = arith.constant 0 : i32
    %c0_i32_1 = arith.constant 0 : i32
    return %c0_i32, %c0_i32_0 : i32, i32
  }
  func.func @transform_2(%arg0: i32) -> (i32, i32) {
    %c0_i32 = arith.constant 0 : i32
    %c0_i32_0 = arith.constant 0 : i32
    %c0_i32_1 = arith.constant 0 : i32
    return %c0_i32, %c0_i32_0 : i32, i32
  }
  func.func @transform_3(%arg0: i32) -> (i32, i32) {
    %c0_i32 = arith.constant 0 : i32
    %c0_i32_0 = arith.constant 0 : i32
    %c0_i32_1 = arith.constant 0 : i32
    return %c0_i32, %c0_i32_0 : i32, i32
  }
  func.func @transform_4(%arg0: i32) -> (i32, i32) {
    %c0_i32 = arith.constant 0 : i32
    %c0_i32_0 = arith.constant 0 : i32
    %c0_i32_1 = arith.constant 0 : i32
    return %c0_i32, %c0_i32_0 : i32, i32
  }
  func.func @transform_5(%arg0: i32) -> (i32, i32) {
    %c0_i32 = arith.constant 0 : i32
    %c0_i32_0 = arith.constant 0 : i32
    return %arg0, %c0_i32 : i32, i32
  }
}

</mosaic_0001>

<llo_original>
// kernel: tpu_custom_call.1
$region0: #{tpu_custom_call.1}
  #allocation0 [shape = 'u32[]', space=smem, size = 0x4, offset = 0x4, fixed_abs, tag = 'smem constant byte address 0x4 - core index']
  #allocation1 [shape = 'u32[144,128]{1,0:T(1,128)}', space=vmem, size = 0x12000, scoped, tag = 'internal scratch']
  %s0 = inlined_call_operand.hbm [shape: f32[8,128], index: 0, kind: input, shape index: {}]
  %s1 = inlined_call_operand.hbm [shape: f32[16,128], index: 1, kind: output, shape index: {}]
  %s2 = sld [smem:[#allocation0]]
  $region41: #{tpu_custom_call.1} parent=0
    _
  %s4 = ssub.s32 1, %s2
  %s5 = scalar_select 0, %s4, %s2
  $region1: #{tpu_custom_call.1} parent=0
    #allocation2 [shape = 'u8[4096]{0}', space=vmem, size = 0x1000, scoped, tag = 'input window, operand 0, single buffered']
    #allocation3 [shape = 's32[2]{0}', space=sflag, size = 0x8, scoped, tag = 'scoped memory for tpu_custom_call.1']
    #allocation4 [shape = 's32[2]{0}', space=sflag, size = 0x8, scoped, tag = 'scoped memory for tpu_custom_call.1']
    #allocation5 [shape = 'u8[8192]{0}', space=vmem, size = 0x2000, scoped, tag = 'output window, operand 0']
    %6 = vsyncpa [#allocation3], 0
    %7 = vsyncpa [#allocation4], 0
    %s8 = scalar_lea.sflag [#allocation4], 1
    %9 = vsyncpa %s8, 0
    loop: start=0, step=1, limit=4
    $region2: #{tpu_custom_call.1} parent=1 // loop_pre_header
      _
    $region3: #{tpu_custom_call.1} parent=1 // loop_header
      %s11 = sphi 0, %s15
      %p12 = scmp.ge.s32.totalorder %s11, 4
      %s19 = sphi 0, %s19
      %s21 = sphi 0, %s19
      %s22 = sphi 0, %s21
      %s36 = sphi 0, %s22
      %s42 = sphi 0, %s44
      %s45 = sphi 0, %s42
      %s46 = sphi 0, %s45
      %s62 = sphi 0, %s46
    $region4: #{tpu_custom_call.1} parent=1 // loop_header_branch
      %14 = sbr.rel (%p12) target = $region8
    $region5: #{tpu_custom_call.1} parent=1 // loop_body
      %s16 = ssub.s32 %s11, 1
      %s17 = ssub.s32 %s11, 2
      %s18 = sadd.s32 %s11, 1
      %s20 = sadd.s32 %s19, 1
      %p23 = scmp.eq.s32.totalorder %s11, 1
      %p24 = scmp.ne.s32.totalorder %s19, %s21
      %p25 = scmp.eq.s32.totalorder %s11, 0
      %p26 = por %p24, %p25
      %p27 = scmp.ne.s32.totalorder %s19, %s21
      %p28 = scmp.eq.s32.totalorder %s16, 1
      %p29 = por %p27, %p28
      %p30 = scmp.ne.s32.totalorder %s21, %s22
      %p31 = scmp.eq.s32.totalorder %s16, 0
      %p32 = por %p30, %p31
      %p33 = scmp.ne.s32.totalorder %s21, %s22
      %p34 = scmp.eq.s32.totalorder %s17, 1
      %p35 = por %p33, %p34
      %p37 = scmp.ne.s32.totalorder %s22, %s36
      %p38 = scmp.eq.s32.totalorder %s17, 0
      %p39 = por %p37, %p38
      %s40 = ssub.s32 %s11, %s18
      %p41 = scmp.eq.s32.totalorder %s40, 0
      %s43 = sadd.s32 %s42, 1
      %s44 = scalar_select %p41, %s42, %s43
      %p47 = pneg %p41
      %p48 = scmp.eq.s32.totalorder %s11, 1
      %p49 = por %p47, %p48
      %p50 = scmp.ne.s32.totalorder %s42, %s45
      %p51 = scmp.eq.s32.totalorder %s11, 0
      %p52 = por %p50, %p51
      %p53 = scmp.ne.s32.totalorder %s42, %s45
      %p54 = scmp.eq.s32.totalorder %s16, 1
      %p55 = por %p53, %p54
      %p56 = scmp.ne.s32.totalorder %s45, %s46
      %p57 = scmp.eq.s32.totalorder %s16, 0
      %p58 = por %p56, %p57
      %p59 = scmp.ne.s32.totalorder %s45, %s46
      %p60 = scmp.eq.s32.totalorder %s17, 1
      %p61 = por %p59, %p60
      %p63 = scmp.ne.s32.totalorder %s46, %s62
      %p64 = scmp.eq.s32.totalorder %s17, 0
      %p65 = por %p63, %p64
      %p66 = scmp.le.s32.totalorder 1, %s11
      %p67 = scmp.lt.s32.totalorder %s11, 3
      %p68 = pnand %p66, %p67
      %p69 = pneg %p68
      // Predicated region
      $region9: #{tpu_custom_call.1} parent=5 // pred_check
        _
      $region10: #{tpu_custom_call.1} parent=5 // pred_check_branch
        %71 = sbr.rel (%p68) target = $region12
      $region11: #{tpu_custom_call.1} parent=5 // pred_region
        %s72 = ssub.s32 %s11, 1
        // Predicated region
        $region13: #{tpu_custom_call.1} parent=11 // pred_check
          %p73 = pneg %p32
        $region14: #{tpu_custom_call.1} parent=11 // pred_check_branch
          %75 = sbr.rel (%p73) target = $region16
        $region15: #{tpu_custom_call.1} parent=11 // pred_region
          %s77 = ssub.s32 128, 128
          %78 = vsyncadd [#allocation3], %s77
          %s80 = sshll.u32 [#allocation2], 4
          %s81 = int_to_ptr.vmem [resolvable:$true] %s80
          %83 = dma.hbm_to_vmem [thread:$0]  %s0, 128, %s81, [#allocation3]
        $region16: #{tpu_custom_call.1} parent=11 // pred_fallthru
          _
      $region12: #{tpu_custom_call.1} parent=5 // pred_fallthru
        _
      %p84 = scmp.lt.s32.totalorder %s11, 2
      // Predicated region
      $region17: #{tpu_custom_call.1} parent=5 // pred_check
        %p85 = pneg %p84
      $region18: #{tpu_custom_call.1} parent=5 // pred_check_branch
        %87 = sbr.rel (%p85) target = $region20
      $region19: #{tpu_custom_call.1} parent=5 // pred_region
        _
      $region20: #{tpu_custom_call.1} parent=5 // pred_fallthru
        _
      %p88 = scmp.le.s32.totalorder 1, %s11
      %p89 = scmp.lt.s32.totalorder %s11, 3
      %p90 = pnand %p88, %p89
      %p91 = pneg %p90
      // Predicated region
      $region21: #{tpu_custom_call.1} parent=5 // pred_check
        _
      $region22: #{tpu_custom_call.1} parent=5 // pred_check_branch
        %93 = sbr.rel (%p90) target = $region24
      $region23: #{tpu_custom_call.1} parent=5 // pred_region
        %s94 = ssub.s32 %s11, 1
        // Predicated region
        $region25: #{tpu_custom_call.1} parent=23 // pred_check
          %p95 = pneg %p32
        $region26: #{tpu_custom_call.1} parent=23 // pred_check_branch
          %97 = sbr.rel (%p95) target = $region28
        $region27: #{tpu_custom_call.1} parent=23 // pred_region
          %98 = dma.done [#allocation3], 128
        $region28: #{tpu_custom_call.1} parent=23 // pred_fallthru
          _
        %p99 = pneg %p32
        %p100 = pneg %p29
        %p101 = pneg %p58
        %p102 = pneg %p55
        %s103 = sand.u32 %s45, 1
        %s104 = scalar_lea.sflag [#allocation4], %s103
        %s105 = sand.u32 %s45, 1
        %s106 = smul.addr %s105, 8
        %s107 = scalar_lea.vmem [#allocation5], %s106
        %v108 = vld [vmem:[#allocation2] sm:$0xff]
        %v109 = vadd.f32 %v108, 1.0
        %110 = vst [vmem:[%s107] sm:$0xff] %v109
        %s111 = sand.u32 %s45, 1
        %s112 = scalar_lea.sflag [#allocation4], %s111
        %s113 = sand.u32 %s45, 1
        %s114 = smul.addr %s113, 8
        %s115 = scalar_lea.vmem [#allocation5], %s114
        // Predicated region
        $region29: #{tpu_custom_call.1} parent=23 // pred_check
          %p116 = pneg %p55
        $region30: #{tpu_custom_call.1} parent=23 // pred_check_branch
          %118 = sbr.rel (%p116) target = $region32
        $region31: #{tpu_custom_call.1} parent=23 // pred_region
          %s120 = ssub.s32 128, 128
          %121 = vsyncadd %s112, %s120
          %s122 = smul.addr %s16, 128
          %s123 = scalar_lea.hbm %s1, %s122
          %s125 = sshll.u32 %s115, 4
          %s126 = int_to_ptr.vmem [resolvable:$true] %s125
          %128 = dma.vmem_to_hbm [thread:$0]  %s126, 128, %s123, %s112
        $region32: #{tpu_custom_call.1} parent=23 // pred_fallthru
          _
      $region24: #{tpu_custom_call.1} parent=5 // pred_fallthru
        _
      %p129 = scmp.le.s32.totalorder 2, %s11
      // Predicated region
      $region33: #{tpu_custom_call.1} parent=5 // pred_check
        %p130 = pneg %p129
      $region34: #{tpu_custom_call.1} parent=5 // pred_check_branch
        %132 = sbr.rel (%p130) target = $region36
      $region35: #{tpu_custom_call.1} parent=5 // pred_region
        %s133 = ssub.s32 %s11, 2
        // Predicated region
        $region37: #{tpu_custom_call.1} parent=35 // pred_check
          %p134 = pneg %p61
        $region38: #{tpu_custom_call.1} parent=35 // pred_check_branch
          %136 = sbr.rel (%p134) target = $region40
        $region39: #{tpu_custom_call.1} parent=35 // pred_region
          %s137 = sand.u32 %s46, 1
          %s138 = scalar_lea.sflag [#allocation4], %s137
          %s139 = sand.u32 %s46, 1
          %s140 = smul.addr %s139, 8
          %s141 = scalar_lea.vmem [#allocation5], %s140
          %142 = dma.done %s138, 128
        $region40: #{tpu_custom_call.1} parent=35 // pred_fallthru
          _
      $region36: #{tpu_custom_call.1} parent=5 // pred_fallthru
        _
    $region6: #{tpu_custom_call.1} parent=1 // loop_footer
      %s15 = sadd.s32 1, %s11
    $region7: #{tpu_custom_call.1} parent=1 // loop_footer_branch
      %10 = sbr.rel target = $region3
    $region8: #{tpu_custom_call.1} parent=1 // loop_exit
      _
    %143 = vsyncpa [#allocation3], 1
    %s144 = scalar_lea.sflag [#allocation3], 1
    %145 = vsyncpa %s144, 1
    %146 = vsyncpa [#allocation4], 1
    %s147 = scalar_lea.sflag [#allocation4], 1
    %148 = vsyncpa %s147, 1

// kernel: tpu_custom_call.1
$region0: #{tpu_custom_call.1}
  #allocation0 [shape = 'u32[]', space=smem, size = 0x4, offset = 0x4, fixed_abs, tag = 'smem constant byte address 0x4 - core index']
  #allocation1 [shape = 'u32[144,128]{1,0:T(1,128)}', space=vmem, size = 0x12000, scoped, tag = 'internal scratch']
  %s0 = inlined_call_operand.hbm [shape: f32[8,128], index: 0, kind: input, shape index: {}]
  %s1 = inlined_call_operand.hbm [shape: f32[128,128], index: 1, kind: input, shape index: {}]
  %s2 = inlined_call_operand.vmem [shape: f32[1,128], index: 2, kind: input, shape index: {}]
  %s3 = inlined_call_operand.hbm [shape: f32[128,128], index: 3, kind: input, shape index: {}]
  %s4 = inlined_call_operand.vmem [shape: f32[1,128], index: 4, kind: input, shape index: {}]
  %s5 = inlined_call_operand.hbm [shape: f32[8,128], index: 5, kind: output, shape index: {}]
  %s6 = sld [smem:[#allocation0]]
  $region42: #{tpu_custom_call.1} parent=0
    _
  %s8 = ssub.s32 1, %s6
  %s9 = scalar_select 0, %s8, %s6
  $region1: #{tpu_custom_call.1} parent=0
    #allocation2 [shape = 'u8[4096]{0}', space=vmem, size = 0x1000, scoped, tag = 'input window, operand 0, single buffered']
    #allocation3 [shape = 's32[1]{0}', space=sflag, size = 0x4, scoped, tag = 'scoped memory for tpu_custom_call.1']
    #allocation4 [shape = 's32[1]{0}', space=sflag, size = 0x4, scoped, tag = 'scoped memory for tpu_custom_call.1']
    #allocation5 [shape = 'u8[65536]{0}', space=vmem, size = 0x10000, scoped, tag = 'input window, operand 1, single buffered']
    #allocation6 [shape = 's32[1]{0}', space=sflag, size = 0x4, scoped, tag = 'scoped memory for tpu_custom_call.1']
    #allocation7 [shape = 'u8[65536]{0}', space=vmem, size = 0x10000, scoped, tag = 'input window, operand 3, single buffered']
    #allocation8 [shape = 'u8[4096]{0}', space=vmem, size = 0x1000, scoped, tag = 'output window, operand 0, single buffered']
    %10 = vsyncpa [#allocation3], 0
    %11 = vsyncpa [#allocation6], 0
    %12 = vsyncpa [#allocation4], 0
    // Predicated region
    $region2: #{tpu_custom_call.1} parent=1 // pred_check
      _
    $region3: #{tpu_custom_call.1} parent=1 // pred_check_branch
      %14 = sbr.rel (0) target = $region5
    $region4: #{tpu_custom_call.1} parent=1 // pred_region
      %s16 = ssub.s32 128, 128
      %17 = vsyncadd [#allocation3], %s16
      %s19 = sshll.u32 [#allocation2], 4
      %s20 = int_to_ptr.vmem [resolvable:$true] %s19
      %22 = dma.hbm_to_vmem [thread:$0]  %s0, 128, %s20, [#allocation3]
    $region5: #{tpu_custom_call.1} parent=1 // pred_fallthru
      _
    // Predicated region
    $region6: #{tpu_custom_call.1} parent=1 // pred_check
      _
    $region7: #{tpu_custom_call.1} parent=1 // pred_check_branch
      %24 = sbr.rel (0) target = $region9
    $region8: #{tpu_custom_call.1} parent=1 // pred_region
      %s26 = ssub.s32 2048, 2048
      %27 = vsyncadd [#allocation6], %s26
      %s28 = sshll.u32 [#allocation5], 4
      %s29 = int_to_ptr.vmem [resolvable:$true] %s28
      %34 = dma.hbm_to_vmem [thread:$0]  %s1, 2048, %s29, [#allocation6], 128, 128, 8
    $region9: #{tpu_custom_call.1} parent=1 // pred_fallthru
      _
    // Predicated region
    $region10: #{tpu_custom_call.1} parent=1 // pred_check
      _
    $region11: #{tpu_custom_call.1} parent=1 // pred_check_branch
      %36 = sbr.rel (0) target = $region13
    $region12: #{tpu_custom_call.1} parent=1 // pred_region
      _
    $region13: #{tpu_custom_call.1} parent=1 // pred_fallthru
      _
    // Predicated region
    $region14: #{tpu_custom_call.1} parent=1 // pred_check
      _
    $region15: #{tpu_custom_call.1} parent=1 // pred_check_branch
      %38 = sbr.rel (0) target = $region17
    $region16: #{tpu_custom_call.1} parent=1 // pred_region
      %s40 = ssub.s32 2048, 2048
      %41 = vsyncadd [#allocation6], %s40
      %s42 = sshll.u32 [#allocation7], 4
      %s43 = int_to_ptr.vmem [resolvable:$true] %s42
      %48 = dma.hbm_to_vmem [thread:$0]  %s3, 2048, %s43, [#allocation6], 128, 128, 8
    $region17: #{tpu_custom_call.1} parent=1 // pred_fallthru
      _
    // Predicated region
    $region18: #{tpu_custom_call.1} parent=1 // pred_check
      _
    $region19: #{tpu_custom_call.1} parent=1 // pred_check_branch
      %50 = sbr.rel (0) target = $region21
    $region20: #{tpu_custom_call.1} parent=1 // pred_region
      _
    $region21: #{tpu_custom_call.1} parent=1 // pred_fallthru
      _
    // Predicated region
    $region22: #{tpu_custom_call.1} parent=1 // pred_check
      _
    $region23: #{tpu_custom_call.1} parent=1 // pred_check_branch
      %52 = sbr.rel (0) target = $region25
    $region24: #{tpu_custom_call.1} parent=1 // pred_region
      %53 = dma.done [#allocation3], 128
    $region25: #{tpu_custom_call.1} parent=1 // pred_fallthru
      _
    // Predicated region
    $region26: #{tpu_custom_call.1} parent=1 // pred_check
      _
    $region27: #{tpu_custom_call.1} parent=1 // pred_check_branch
      %55 = sbr.rel (0) target = $region29
    $region28: #{tpu_custom_call.1} parent=1 // pred_region
      %56 = dma.done [#allocation6], 2048
    $region29: #{tpu_custom_call.1} parent=1 // pred_fallthru
      _
    // Predicated region
    $region30: #{tpu_custom_call.1} parent=1 // pred_check
      _
    $region31: #{tpu_custom_call.1} parent=1 // pred_check_branch
      %58 = sbr.rel (0) target = $region33
    $region32: #{tpu_custom_call.1} parent=1 // pred_region
      %59 = dma.done [#allocation6], 2048
    $region33: #{tpu_custom_call.1} parent=1 // pred_fallthru
      _
    %v60 = vld [vmem:[#allocation2] sm:$0xff]
    %v61 = vld [vmem:[#allocation5] sm:$0xff]
    %v62 = vld [vmem:[#allocation5 + $0x8] sm:$0xff]
    %v63 = vld [vmem:[#allocation5 + $0x10] sm:$0xff]
    %v64 = vld [vmem:[#allocation5 + $0x18] sm:$0xff]
    %v65 = vld [vmem:[#allocation5 + $0x20] sm:$0xff]
    %v66 = vld [vmem:[#allocation5 + $0x28] sm:$0xff]
    %v67 = vld [vmem:[#allocation5 + $0x30] sm:$0xff]
    %v68 = vld [vmem:[#allocation5 + $0x38] sm:$0xff]
    %v69 = vld [vmem:[#allocation5 + $0x40] sm:$0xff]
    %v70 = vld [vmem:[#allocation5 + $0x48] sm:$0xff]
    %v71 = vld [vmem:[#allocation5 + $0x50] sm:$0xff]
    %v72 = vld [vmem:[#allocation5 + $0x58] sm:$0xff]
    %v73 = vld [vmem:[#allocation5 + $0x60] sm:$0xff]
    %v74 = vld [vmem:[#allocation5 + $0x68] sm:$0xff]
    %v75 = vld [vmem:[#allocation5 + $0x70] sm:$0xff]
    %v76 = vld [vmem:[#allocation5 + $0x78] sm:$0xff]
    %v77 = vld [vmem:[%s2] sm:$0x1]
    %v79 = vlaneseq
    %v80 = vshrl.u32 %v79, 7
    %v81 = vsub.s32 0, %v80
    %v82 = vrot.slane %v77, %v81
    %84 = vmatprep.subr.mxu0 0.0
    %85 = vmatpush1.msra.mxu0 %v61
    %86 = vmatprep.subr.mxu0 0.0
    %87 = vmatpush1.msra.mxu0 %v62
    %88 = vmatprep.subr.mxu0 0.0
    %89 = vmatpush1.msra.mxu0 %v63
    %90 = vmatprep.subr.mxu0 0.0
    %91 = vmatpush1.msra.mxu0 %v64
    %92 = vmatprep.subr.mxu0 0.0
    %93 = vmatpush1.msra.mxu0 %v65
    %94 = vmatprep.subr.mxu0 0.0
    %95 = vmatpush1.msra.mxu0 %v66
    %96 = vmatprep.subr.mxu0 0.0
    %97 = vmatpush1.msra.mxu0 %v67
    %98 = vmatprep.subr.mxu0 0.0
    %99 = vmatpush1.msra.mxu0 %v68
    %100 = vmatprep.subr.mxu0 0.0
    %101 = vmatpush1.msra.mxu0 %v69
    %102 = vmatprep.subr.mxu0 0.0
    %103 = vmatpush1.msra.mxu0 %v70
    %104 = vmatprep.subr.mxu0 0.0
    %105 = vmatpush1.msra.mxu0 %v71
    %106 = vmatprep.subr.mxu0 0.0
    %107 = vmatpush1.msra.mxu0 %v72
    %108 = vmatprep.subr.mxu0 0.0
    %109 = vmatpush1.msra.mxu0 %v73
    %110 = vmatprep.subr.mxu0 0.0
    %111 = vmatpush1.msra.mxu0 %v74
    %112 = vmatprep.subr.mxu0 0.0
    %113 = vmatpush1.msra.mxu0 %v75
    %114 = vmatprep.subr.mxu0 0.0
    %115 = vmatpush1.msra.mxu0 %v76
    %116 = vmatprep.subr.mxu0 0.0
    %117 = vmatpush1.msra.mxu0 0.0
    %118 = vmatprep.subr.mxu0 0.0
    %119 = vmatpush1.msra.mxu0 0.0
    %120 = vmatprep.subr.mxu0 0.0
    %121 = vmatpush1.msra.mxu0 0.0
    %122 = vmatprep.subr.mxu0 0.0
    %123 = vmatpush1.msra.mxu0 0.0
    %124 = vmatprep.subr.mxu0 0.0
    %125 = vmatpush1.msra.mxu0 0.0
    %126 = vmatprep.subr.mxu0 0.0
    %127 = vmatpush1.msra.mxu0 0.0
    %128 = vmatprep.subr.mxu0 0.0
    %129 = vmatpush1.msra.mxu0 0.0
    %130 = vmatprep.subr.mxu0 0.0
    %131 = vmatpush1.msra.mxu0 0.0
    %132 = vmatprep.subr.mxu0 0.0
    %133 = vmatpush1.msra.mxu0 0.0
    %134 = vmatprep.subr.mxu0 0.0
    %135 = vmatpush1.msra.mxu0 0.0
    %136 = vmatprep.subr.mxu0 0.0
    %137 = vmatpush1.msra.mxu0 0.0
    %138 = vmatprep.subr.mxu0 0.0
    %139 = vmatpush1.msra.mxu0 0.0
    %140 = vmatprep.subr.mxu0 0.0
    %141 = vmatpush1.msra.mxu0 0.0
    %142 = vmatprep.subr.mxu0 0.0
    %143 = vmatpush1.msra.mxu0 0.0
    %144 = vmatprep.subr.mxu0 0.0
    %145 = vmatpush1.msra.mxu0 0.0
    %146 = vmatprep.subr.mxu0 0.0
    %147 = vmatpush1.msra.mxu0 0.0
    %148 = vmatprep.mubr.f32.mxu0 0.0
    %149 = vmatmul.mubr.f32.gmra.mrb[0].mxu0 %v60
    %v150 = vpop.f32.mrb[0].mxu0
    %v151 = vadd.f32 %v82, %v150
    %v152 = vpop.f32.mrb[0].mxu0
    %153 = vdwg.mxu0
    %v154 = vmax.f32 %v151, 0.0
    %v155 = vld [vmem:[#allocation7] sm:$0xff]
    %v156 = vld [vmem:[#allocation7 + $0x8] sm:$0xff]
    %v157 = vld [vmem:[#allocation7 + $0x10] sm:$0xff]
    %v158 = vld [vmem:[#allocation7 + $0x18] sm:$0xff]
    %v159 = vld [vmem:[#allocation7 + $0x20] sm:$0xff]
    %v160 = vld [vmem:[#allocation7 + $0x28] sm:$0xff]
    %v161 = vld [vmem:[#allocation7 + $0x30] sm:$0xff]
    %v162 = vld [vmem:[#allocation7 + $0x38] sm:$0xff]
    %v163 = vld [vmem:[#allocation7 + $0x40] sm:$0xff]
    %v164 = vld [vmem:[#allocation7 + $0x48] sm:$0xff]
    %v165 = vld [vmem:[#allocation7 + $0x50] sm:$0xff]
    %v166 = vld [vmem:[#allocation7 + $0x58] sm:$0xff]
    %v167 = vld [vmem:[#allocation7 + $0x60] sm:$0xff]
    %v168 = vld [vmem:[#allocation7 + $0x68] sm:$0xff]
    %v169 = vld [vmem:[#allocation7 + $0x70] sm:$0xff]
    %v170 = vld [vmem:[#allocation7 + $0x78] sm:$0xff]
    %v171 = vld [vmem:[%s4] sm:$0x1]
    %v173 = vlaneseq
    %v174 = vshrl.u32 %v173, 7
    %v175 = vsub.s32 0, %v174
    %v176 = vrot.slane %v171, %v175
    %178 = vmatprep.subr.mxu0 0.0
    %179 = vmatpush1.msra.mxu0 %v155
    %180 = vmatprep.subr.mxu0 0.0
    %181 = vmatpush1.msra.mxu0 %v156
    %182 = vmatprep.subr.mxu0 0.0
    %183 = vmatpush1.msra.mxu0 %v157
    %184 = vmatprep.subr.mxu0 0.0
    %185 = vmatpush1.msra.mxu0 %v158
    %186 = vmatprep.subr.mxu0 0.0
    %187 = vmatpush1.msra.mxu0 %v159
    %188 = vmatprep.subr.mxu0 0.0
    %189 = vmatpush1.msra.mxu0 %v160
    %190 = vmatprep.subr.mxu0 0.0
    %191 = vmatpush1.msra.mxu0 %v161
    %192 = vmatprep.subr.mxu0 0.0
    %193 = vmatpush1.msra.mxu0 %v162
    %194 = vmatprep.subr.mxu0 0.0
    %195 = vmatpush1.msra.mxu0 %v163
    %196 = vmatprep.subr.mxu0 0.0
    %197 = vmatpush1.msra.mxu0 %v164
    %198 = vmatprep.subr.mxu0 0.0
    %199 = vmatpush1.msra.mxu0 %v165
    %200 = vmatprep.subr.mxu0 0.0
    %201 = vmatpush1.msra.mxu0 %v166
    %202 = vmatprep.subr.mxu0 0.0
    %203 = vmatpush1.msra.mxu0 %v167
    %204 = vmatprep.subr.mxu0 0.0
    %205 = vmatpush1.msra.mxu0 %v168
    %206 = vmatprep.subr.mxu0 0.0
    %207 = vmatpush1.msra.mxu0 %v169
    %208 = vmatprep.subr.mxu0 0.0
    %209 = vmatpush1.msra.mxu0 %v170
    %210 = vmatprep.subr.mxu0 0.0
    %211 = vmatpush1.msra.mxu0 0.0
    %212 = vmatprep.subr.mxu0 0.0
    %213 = vmatpush1.msra.mxu0 0.0
    %214 = vmatprep.subr.mxu0 0.0
    %215 = vmatpush1.msra.mxu0 0.0
    %216 = vmatprep.subr.mxu0 0.0
    %217 = vmatpush1.msra.mxu0 0.0
    %218 = vmatprep.subr.mxu0 0.0
    %219 = vmatpush1.msra.mxu0 0.0
    %220 = vmatprep.subr.mxu0 0.0
    %221 = vmatpush1.msra.mxu0 0.0
    %222 = vmatprep.subr.mxu0 0.0
    %223 = vmatpush1.msra.mxu0 0.0
    %224 = vmatprep.subr.mxu0 0.0
    %225 = vmatpush1.msra.mxu0 0.0
    %226 = vmatprep.subr.mxu0 0.0
    %227 = vmatpush1.msra.mxu0 0.0
    %228 = vmatprep.subr.mxu0 0.0
    %229 = vmatpush1.msra.mxu0 0.0
    %230 = vmatprep.subr.mxu0 0.0
    %231 = vmatpush1.msra.mxu0 0.0
    %232 = vmatprep.subr.mxu0 0.0
    %233 = vmatpush1.msra.mxu0 0.0
    %234 = vmatprep.subr.mxu0 0.0
    %235 = vmatpush1.msra.mxu0 0.0
    %236 = vmatprep.subr.mxu0 0.0
    %237 = vmatpush1.msra.mxu0 0.0
    %238 = vmatprep.subr.mxu0 0.0
    %239 = vmatpush1.msra.mxu0 0.0
    %240 = vmatprep.subr.mxu0 0.0
    %241 = vmatpush1.msra.mxu0 0.0
    %242 = vmatprep.mubr.f32.mxu0 0.0
    %243 = vmatmul.mubr.f32.gmra.mrb[0].mxu0 %v154
    %v244 = vpop.f32.mrb[0].mxu0
    %v245 = vadd.f32 %v176, %v244
    %v246 = vpop.f32.mrb[0].mxu0
    %247 = vdwg.mxu0
    %v248 = vadd.f32 %v60, %v245
    %v249 = vmax.f32 %v248, 0.0
    %250 = vst [vmem:[#allocation8] sm:$0xff] %v249
    // Predicated region
    $region34: #{tpu_custom_call.1} parent=1 // pred_check
      _
    $region35: #{tpu_custom_call.1} parent=1 // pred_check_branch
      %252 = sbr.rel (0) target = $region37
    $region36: #{tpu_custom_call.1} parent=1 // pred_region
      %s254 = ssub.s32 128, 128
      %255 = vsyncadd [#allocation4], %s254
      %s257 = sshll.u32 [#allocation8], 4
      %s258 = int_to_ptr.vmem [resolvable:$true] %s257
      %260 = dma.vmem_to_hbm [thread:$0]  %s258, 128, %s5, [#allocation4]
    $region37: #{tpu_custom_call.1} parent=1 // pred_fallthru
      _
    // Predicated region
    $region38: #{tpu_custom_call.1} parent=1 // pred_check
      _
    $region39: #{tpu_custom_call.1} parent=1 // pred_check_branch
      %262 = sbr.rel (0) target = $region41
    $region40: #{tpu_custom_call.1} parent=1 // pred_region
      %263 = dma.done [#allocation4], 128
    $region41: #{tpu_custom_call.1} parent=1 // pred_fallthru
      _
    %264 = vsyncpa [#allocation3], 1
    %265 = vsyncpa [#allocation6], 1
    %266 = vsyncpa [#allocation4], 1

</llo_original>
